<compile_context>
chip_gen: v7x
topology: tpu7x:2x2x1
jax: 0.10.0
libtpu: 0.0.40
codegen_flags: <defaults>
</compile_context>

<pallas_src>
import math
import jax
import jax.numpy as jnp
from jax.experimental import pallas as pl
from jax.experimental.pallas import tpu as pltpu

IN_FEATURES = 3
# TODO(synk): the reference declares torch.nn.Linear(3, -1), which is invalid
# in PyTorch (out_features must be > 0); OUT_FEATURES=8 is an arbitrary
# stand-in and should be confirmed with the owner of the reference.
OUT_FEATURES = 8

LANE = 128                       # TPU lane width
SUBLANE = 8                      # f32 sublane rows
PACK = LANE // OUT_FEATURES      # 16 logical rows per 128-lane output row
PACKED_K = PACK * IN_FEATURES    # 48 = packed contraction width


def _packed_linear_where_kernel(x_ref, w_ref, b_ref, o_ref):
    """v1 = x_packed @ W_blockdiag + b_packed ; out = where(v1>0, v1, v1*-0.1).

    x_ref: [tm, 48]   (16 logical rows of 3 features per packed row)
    w_ref: [48, 128]  block-diagonal, 16 copies of the 3x8 weight
    b_ref: [1, 128]   bias tiled 16x
    o_ref: [tm, 128]  16 logical 8-wide outputs per packed row (lane dense)
    """
    v1 = jnp.dot(x_ref[...], w_ref[...],
                 preferred_element_type=jnp.float32) + b_ref[...]
    o_ref[...] = jnp.where(v1 > 0, v1, v1 * -0.1).astype(o_ref.dtype)


def pack_params(w_t, b):
    """One-time constant prep (hoisted out of the per-call wrapper).

    w_t: [IN_FEATURES, OUT_FEATURES] (pre-transposed torch weight); b: [OUT].
    Returns block-diagonal weight [48, 128] and tiled bias [1, 128].
    """
    K, N = w_t.shape
    assert (K, N) == (IN_FEATURES, OUT_FEATURES)
    w_bd = jnp.kron(jnp.eye(PACK, dtype=w_t.dtype), w_t)   # [48, 128]
    b_p = jnp.tile(b, (PACK,))[None, :]                     # [1, 128]
    return w_bd, b_p


def linear_where(x, w_bd, b_p, *, tile_m=4096, out_dtype=jnp.float32):
    """x: [B, IN_FEATURES]; w_bd/b_p from pack_params(). Returns [B, OUT]."""
    B, K = x.shape
    assert K == IN_FEATURES
    # tile_m in logical rows; must map to a sublane-aligned packed tile.
    assert tile_m % (PACK * SUBLANE) == 0, "tile_m must be a multiple of 128"

    x = x.astype(jnp.float32)
    # Pad batch only to a multiple of PACK (<= 15 extra rows) so the 16-row
    # packing reshape is a contiguous no-copy view.
    b_pad = -(-B // PACK) * PACK
    if b_pad != B:
        x = jnp.zeros((b_pad, K), jnp.float32).at[:B, :].set(x)
    xp = x.reshape(b_pad // PACK, PACKED_K)       # [mp, 48], no-copy
    mp = xp.shape[0]

    if B <= tile_m:
        # Small batch: single block, no grid / pipeline machinery.
        # TODO(synk): at B ~ 1-8 a plain fused XLA matmul+where is likely
        # faster than any kernel launch; kept in Pallas per task requirements.
        out = pl.pallas_call(
            _packed_linear_where_kernel,
            out_shape=jax.ShapeDtypeStruct((mp, LANE), out_dtype),
            in_specs=[
                pl.BlockSpec(memory_space=pltpu.MemorySpace.VMEM),
                pl.BlockSpec(memory_space=pltpu.MemorySpace.VMEM),
                pl.BlockSpec(memory_space=pltpu.MemorySpace.VMEM),
            ],
            out_specs=pl.BlockSpec(memory_space=pltpu.MemorySpace.VMEM),
        )(xp, w_bd, b_p)
    else:
        # Large batch: tile the packed-row axis; tiny weight/bias stay
        # resident via constant index_maps.  Grid always has >= 2 steps here
        # (B > tile_m), so "parallel" lets both v7x TensorCores work.
        tile_mp = tile_m // PACK                   # packed rows per tile
        grid = (pl.cdiv(mp, tile_mp),)             # ragged tail -> partial block
        out = pl.pallas_call(
            _packed_linear_where_kernel,
            out_shape=jax.ShapeDtypeStruct((mp, LANE), out_dtype),
            grid_spec=pltpu.PrefetchScalarGridSpec(
                num_scalar_prefetch=0,
                grid=grid,
                in_specs=[
                    pl.BlockSpec((tile_mp, PACKED_K), lambda i: (i, 0)),
                    pl.BlockSpec((PACKED_K, LANE), lambda i: (0, 0)),
                    pl.BlockSpec((1, LANE), lambda i: (0, 0)),
                ],
                out_specs=pl.BlockSpec((tile_mp, LANE), lambda i: (i, 0)),
            ),
            compiler_params=pltpu.CompilerParams(
                dimension_semantics=("parallel",)
            ),
        )(xp, w_bd, b_p)

    # Unpack: [mp, 128] -> [b_pad, 8] (contiguous, no-copy) -> drop pad rows.
    return out.reshape(b_pad, OUT_FEATURES)[:B]


def init_params(key):
    # Deterministic init mimicking torch.nn.Linear default:
    # uniform(-1/sqrt(in_features), 1/sqrt(in_features)).
    kw, kb = jax.random.split(key)
    bound = 1.0 / math.sqrt(IN_FEATURES)
    # PyTorch weight is [out, in]; store transposed [in, out] for the kernel.
    w = jax.random.uniform(
        kw, (OUT_FEATURES, IN_FEATURES), jnp.float32, -bound, bound
    )
    b = jax.random.uniform(kb, (OUT_FEATURES,), jnp.float32, -bound, bound)
    return w.T, b


def _ref(x, w_t, b):
    v1 = x @ w_t + b
    return jnp.where(v1 > 0, v1, v1 * -0.1)


if __name__ == "__main__":
    key = jax.random.PRNGKey(0)
    k_x1, k_x2, k_x3, k_p = jax.random.split(key, 4)
    w_t, b = init_params(k_p)
    w_bd, b_p = pack_params(w_t, b)      # hoisted one-time constant prep

    # Small case consistent with the reference input torch.randn(1, 3)
    # (batch=2 of the same feature width) -> single-block path.
    x_small = jax.random.normal(k_x1, (2, IN_FEATURES), jnp.float32)
    out_small = jax.block_until_ready(linear_where(x_small, w_bd, b_p))
    assert out_small.shape == (2, OUT_FEATURES)
    assert jnp.allclose(out_small, _ref(x_small, w_t, b), atol=1e-5), \
        "small-batch mismatch vs reference"

    # Grid path with an evenly divisible batch (tile_m shrunk for the test).
    x_big = jax.random.normal(k_x2, (512, IN_FEATURES), jnp.float32)
    out_big = jax.block_until_ready(linear_where(x_big, w_bd, b_p, tile_m=128))
    assert jnp.allclose(out_big, _ref(x_big, w_t, b), atol=1e-5), \
        "tiled-batch mismatch vs reference"

    # Grid path with a ragged batch (non-multiple of 16 and of the tile) to
    # exercise the pad-to-16 + partial-last-block handling.
    x_rag = jax.random.normal(k_x3, (300, IN_FEATURES), jnp.float32)
    out_rag = jax.block_until_ready(linear_where(x_rag, w_bd, b_p, tile_m=128))
    assert out_rag.shape == (300, OUT_FEATURES)
    assert jnp.allclose(out_rag, _ref(x_rag, w_t, b), atol=1e-5), \
        "ragged-batch mismatch vs reference"

    print("KERNEL_OK")
</pallas_src>

<mosaic_0001>
module attributes {stable_mosaic.version = 11 : i64} {
  func.func @_packed_linear_where_kernel(%arg0: memref<1x48xf32, #tpu.memory_space<vmem>>, %arg1: memref<48x128xf32, #tpu.memory_space<vmem>>, %arg2: memref<1x128xf32, #tpu.memory_space<vmem>>, %arg3: memref<1x128xf32, #tpu.memory_space<vmem>>) attributes {dimension_semantics = [], scalar_prefetch = 0 : i64, scratch_operands = 0 : i64, tpu.core_type = #tpu.core_type<tc>} {
    %c0 = arith.constant 0 : index
    %c0_0 = arith.constant 0 : index
    %0 = vector.load %arg0[%c0, %c0_0] : memref<1x48xf32, #tpu.memory_space<vmem>>, vector<1x48xf32>
    %c0_1 = arith.constant 0 : index
    %c0_2 = arith.constant 0 : index
    %1 = vector.load %arg1[%c0_1, %c0_2] : memref<48x128xf32, #tpu.memory_space<vmem>>, vector<48x128xf32>
    %cst = arith.constant dense<0.000000e+00> : vector<1x128xf32>
    %2 = tpu.matmul %0, %1, %cst {dimension_numbers = #tpu.dot_dimension_numbers<[1], [0], [0], [1], [0, 0, 1, 1], [], []>} : vector<1x48xf32>, vector<48x128xf32>, vector<1x128xf32> -> vector<1x128xf32>
    %c0_3 = arith.constant 0 : index
    %c0_4 = arith.constant 0 : index
    %3 = vector.load %arg2[%c0_3, %c0_4] : memref<1x128xf32, #tpu.memory_space<vmem>>, vector<1x128xf32>
    %4 = arith.addf %2, %3 : vector<1x128xf32>
    %cst_5 = arith.constant 0.000000e+00 : f32
    %5 = vector.broadcast %cst_5 : f32 to vector<1x128xf32>
    %6 = arith.cmpf ogt, %4, %5 : vector<1x128xf32>
    %cst_6 = arith.constant -1.000000e-01 : f32
    %7 = vector.broadcast %cst_6 : f32 to vector<1x128xf32>
    %8 = arith.mulf %4, %7 : vector<1x128xf32>
    %9 = arith.select %6, %4, %8 : vector<1x128xi1>, vector<1x128xf32>
    %c0_7 = arith.constant 0 : index
    %c0_8 = arith.constant 0 : index
    %10 = vector.load %arg3[%c0_7, %c0_8] : memref<1x128xf32, #tpu.memory_space<vmem>>, vector<1x128xf32>
    tpu.vector_store %arg3[%c0_7, %c0_8], %9 {strides = array<i32>} : memref<1x128xf32, #tpu.memory_space<vmem>>, vector<1x128xf32>,
    return
  }
}

</mosaic_0001>

<llo_original>
// kernel: tpu_custom_call.1
$region0: #{tpu_custom_call.1}
  #allocation0 [shape = 'u32[]', space=smem, size = 0x4, offset = 0x4, fixed_abs, tag = 'smem constant byte address 0x4 - core index']
  #allocation1 [shape = 'u32[144,128]{1,0:T(1,128)}', space=vmem, size = 0x12000, scoped, tag = 'internal scratch']
  %s0 = inlined_call_operand.hbm [shape: f32[1,48], index: 0, kind: input, shape index: {}]
  %s1 = inlined_call_operand.hbm [shape: f32[48,128], index: 1, kind: input, shape index: {}]
  %s2 = inlined_call_operand.vmem [shape: f32[1,128], index: 2, kind: input, shape index: {}]
  %s3 = inlined_call_operand.hbm [shape: f32[1,128], index: 3, kind: output, shape index: {}]
  %s4 = sld [smem:[#allocation0]]
  $region30: #{tpu_custom_call.1} parent=0
    _
  %s6 = ssub.s32 1, %s4
  %s7 = scalar_select 0, %s6, %s4
  $region1: #{tpu_custom_call.1} parent=0
    #allocation2 [shape = 'u8[512]{0}', space=vmem, size = 0x400, scoped, tag = 'input window, operand 0, single buffered']
    #allocation3 [shape = 's32[1]{0}', space=sflag, size = 0x4, scoped, tag = 'scoped memory for tpu_custom_call.1']
    #allocation4 [shape = 's32[1]{0}', space=sflag, size = 0x4, scoped, tag = 'scoped memory for tpu_custom_call.1']
    #allocation5 [shape = 'u8[24576]{0}', space=vmem, size = 0x6000, scoped, tag = 'input window, operand 1, single buffered']
    #allocation6 [shape = 's32[1]{0}', space=sflag, size = 0x4, scoped, tag = 'scoped memory for tpu_custom_call.1']
    #allocation7 [shape = 'u8[512]{0}', space=vmem, size = 0x400, scoped, tag = 'output window, operand 0, single buffered']
    %8 = vsyncpa [#allocation3], 0
    %9 = vsyncpa [#allocation6], 0
    %10 = vsyncpa [#allocation4], 0
    // Predicated region
    $region2: #{tpu_custom_call.1} parent=1 // pred_check
      _
    $region3: #{tpu_custom_call.1} parent=1 // pred_check_branch
      %12 = sbr.rel (0) target = $region5
    $region4: #{tpu_custom_call.1} parent=1 // pred_region
      %s14 = ssub.s32 16, 16
      %15 = vsyncadd [#allocation3], %s14
      %s17 = sshll.u32 [#allocation2], 4
      %s18 = int_to_ptr.vmem [resolvable:$true] %s17
      %20 = dma.hbm_to_vmem [thread:$0]  %s0, 16, %s18, [#allocation3]
    $region5: #{tpu_custom_call.1} parent=1 // pred_fallthru
      _
    // Predicated region
    $region6: #{tpu_custom_call.1} parent=1 // pred_check
      _
    $region7: #{tpu_custom_call.1} parent=1 // pred_check_branch
      %22 = sbr.rel (0) target = $region9
    $region8: #{tpu_custom_call.1} parent=1 // pred_region
      %s24 = ssub.s32 768, 768
      %25 = vsyncadd [#allocation6], %s24
      %s26 = sshll.u32 [#allocation5], 4
      %s27 = int_to_ptr.vmem [resolvable:$true] %s26
      %32 = dma.hbm_to_vmem [thread:$0]  %s1, 768, %s27, [#allocation6], 128, 128, 8
    $region9: #{tpu_custom_call.1} parent=1 // pred_fallthru
      _
    // Predicated region
    $region10: #{tpu_custom_call.1} parent=1 // pred_check
      _
    $region11: #{tpu_custom_call.1} parent=1 // pred_check_branch
      %34 = sbr.rel (0) target = $region13
    $region12: #{tpu_custom_call.1} parent=1 // pred_region
      _
    $region13: #{tpu_custom_call.1} parent=1 // pred_fallthru
      _
    // Predicated region
    $region14: #{tpu_custom_call.1} parent=1 // pred_check
      _
    $region15: #{tpu_custom_call.1} parent=1 // pred_check_branch
      %36 = sbr.rel (0) target = $region17
    $region16: #{tpu_custom_call.1} parent=1 // pred_region
      %37 = dma.done [#allocation3], 16
    $region17: #{tpu_custom_call.1} parent=1 // pred_fallthru
      _
    // Predicated region
    $region18: #{tpu_custom_call.1} parent=1 // pred_check
      _
    $region19: #{tpu_custom_call.1} parent=1 // pred_check_branch
      %39 = sbr.rel (0) target = $region21
    $region20: #{tpu_custom_call.1} parent=1 // pred_region
      %40 = dma.done [#allocation6], 768
    $region21: #{tpu_custom_call.1} parent=1 // pred_fallthru
      _
    %v41 = vld [vmem:[#allocation2] sm:$0x1]
    %v42 = vld [vmem:[#allocation5] sm:$0xff]
    %v43 = vld [vmem:[#allocation5 + $0x8] sm:$0xff]
    %v44 = vld [vmem:[#allocation5 + $0x10] sm:$0xff]
    %v45 = vld [vmem:[#allocation5 + $0x18] sm:$0xff]
    %v46 = vld [vmem:[#allocation5 + $0x20] sm:$0xff]
    %v47 = vld [vmem:[#allocation5 + $0x28] sm:$0xff]
    %v48 = vld [vmem:[%s2] sm:$0x1]
    %vm49 = vcmask 392192
    %v51 = vsel %vm49, %v41, 0
    %53 = vmatprep.subr.mxu0 0.0
    %54 = vmatpush1.msra.mxu0 %v42
    %55 = vmatprep.subr.mxu0 0.0
    %56 = vmatpush1.msra.mxu0 %v43
    %57 = vmatprep.subr.mxu0 0.0
    %58 = vmatpush1.msra.mxu0 %v44
    %59 = vmatprep.subr.mxu0 0.0
    %60 = vmatpush1.msra.mxu0 %v45
    %61 = vmatprep.subr.mxu0 0.0
    %62 = vmatpush1.msra.mxu0 %v46
    %63 = vmatprep.subr.mxu0 0.0
    %64 = vmatpush1.msra.mxu0 %v47
    %65 = vmatprep.subr.mxu0 0.0
    %66 = vmatpush1.msra.mxu0 0.0
    %67 = vmatprep.subr.mxu0 0.0
    %68 = vmatpush1.msra.mxu0 0.0
    %69 = vmatprep.subr.mxu0 0.0
    %70 = vmatpush1.msra.mxu0 0.0
    %71 = vmatprep.subr.mxu0 0.0
    %72 = vmatpush1.msra.mxu0 0.0
    %73 = vmatprep.subr.mxu0 0.0
    %74 = vmatpush1.msra.mxu0 0.0
    %75 = vmatprep.subr.mxu0 0.0
    %76 = vmatpush1.msra.mxu0 0.0
    %77 = vmatprep.subr.mxu0 0.0
    %78 = vmatpush1.msra.mxu0 0.0
    %79 = vmatprep.subr.mxu0 0.0
    %80 = vmatpush1.msra.mxu0 0.0
    %81 = vmatprep.subr.mxu0 0.0
    %82 = vmatpush1.msra.mxu0 0.0
    %83 = vmatprep.subr.mxu0 0.0
    %84 = vmatpush1.msra.mxu0 0.0
    %85 = vmatprep.subr.mxu0 0.0
    %86 = vmatpush1.msra.mxu0 0.0
    %87 = vmatprep.subr.mxu0 0.0
    %88 = vmatpush1.msra.mxu0 0.0
    %89 = vmatprep.subr.mxu0 0.0
    %90 = vmatpush1.msra.mxu0 0.0
    %91 = vmatprep.subr.mxu0 0.0
    %92 = vmatpush1.msra.mxu0 0.0
    %93 = vmatprep.subr.mxu0 0.0
    %94 = vmatpush1.msra.mxu0 0.0
    %95 = vmatprep.subr.mxu0 0.0
    %96 = vmatpush1.msra.mxu0 0.0
    %97 = vmatprep.subr.mxu0 0.0
    %98 = vmatpush1.msra.mxu0 0.0
    %99 = vmatprep.subr.mxu0 0.0
    %100 = vmatpush1.msra.mxu0 0.0
    %101 = vmatprep.subr.mxu0 0.0
    %102 = vmatpush1.msra.mxu0 0.0
    %103 = vmatprep.subr.mxu0 0.0
    %104 = vmatpush1.msra.mxu0 0.0
    %105 = vmatprep.subr.mxu0 0.0
    %106 = vmatpush1.msra.mxu0 0.0
    %107 = vmatprep.subr.mxu0 0.0
    %108 = vmatpush1.msra.mxu0 0.0
    %109 = vmatprep.subr.mxu0 0.0
    %110 = vmatpush1.msra.mxu0 0.0
    %111 = vmatprep.subr.mxu0 0.0
    %112 = vmatpush1.msra.mxu0 0.0
    %113 = vmatprep.subr.mxu0 0.0
    %114 = vmatpush1.msra.mxu0 0.0
    %115 = vmatprep.subr.mxu0 0.0
    %116 = vmatpush1.msra.mxu0 0.0
    %117 = vmatprep.mubr.f32.mxu0 0.0
    %118 = vmatmul.mubr.f32.gmra.mrb[0].mxu0 %v51
    %v119 = vpop.f32.mrb[0].mxu0
    %v120 = vadd.f32 %v48, %v119
    %v121 = vpop.f32.mrb[0].mxu0
    %122 = vdwg.mxu0
    %vm123 = vcmp.gt.f32.partialorder %v120, 0.0
    %v124 = vmul.f32 %v120, -0.1
    %v125 = vsel %vm123, %v120, %v124
    %126 = vst [vmem:[#allocation7] sm:$0x1] %v125
    // Predicated region
    $region22: #{tpu_custom_call.1} parent=1 // pred_check
      _
    $region23: #{tpu_custom_call.1} parent=1 // pred_check_branch
      %128 = sbr.rel (0) target = $region25
    $region24: #{tpu_custom_call.1} parent=1 // pred_region
      %s130 = ssub.s32 16, 16
      %131 = vsyncadd [#allocation4], %s130
      %s133 = sshll.u32 [#allocation7], 4
      %s134 = int_to_ptr.vmem [resolvable:$true] %s133
      %136 = dma.vmem_to_hbm [thread:$0]  %s134, 16, %s3, [#allocation4]
    $region25: #{tpu_custom_call.1} parent=1 // pred_fallthru
      _
    // Predicated region
    $region26: #{tpu_custom_call.1} parent=1 // pred_check
      _
    $region27: #{tpu_custom_call.1} parent=1 // pred_check_branch
      %138 = sbr.rel (0) target = $region29
    $region28: #{tpu_custom_call.1} parent=1 // pred_region
      %139 = dma.done [#allocation4], 16
    $region29: #{tpu_custom_call.1} parent=1 // pred_fallthru
      _
    %140 = vsyncpa [#allocation3], 1
    %141 = vsyncpa [#allocation6], 1
    %142 = vsyncpa [#allocation4], 1

</llo_original>
